<compile_context>
chip_gen: v5e
topology: v5e:2x2
jax: 0.10.0
libtpu: 0.0.40
codegen_flags: <defaults>
</compile_context>

<pallas_src>
import functools

import jax
import jax.numpy as jnp
import numpy as np
from jax.experimental import pallas as pl
from jax.experimental.pallas import tpu as pltpu


def _round_up(x, m):
    return (x + m - 1) // m * m


# ----------------------------- Pallas kernel -------------------------------
def _linear_kernel(x_ref, w_ref, b_ref, o_ref):
    # One fused MXU dot (f32 accumulation) + VPU bias add. Output last dim is
    # a multiple of 128 -> lane-dense unmasked stores.
    x = x_ref[...]
    if w_ref.dtype == jnp.bfloat16:       # optional reduced-precision compute
        x = x.astype(jnp.bfloat16)
    o_ref[...] = (jnp.dot(x, w_ref[...], preferred_element_type=jnp.float32)
                  + b_ref[...]).astype(o_ref.dtype)


_VMEM_BUDGET = 28 << 20   # conservative: fits v7x's 32 MiB default scoped VMEM


def _tile_vmem_bytes(tm, K, Np, w_bytes):
    """Rough VMEM need: double-buffered x/out tiles + resident weight/bias."""
    Kl = _round_up(K, 128)
    return (2 * tm * Kl * 4          # x tile (f32), double-buffered
            + 2 * tm * Np * 4        # out tile (f32), double-buffered
            + 2 * K * Np * w_bytes   # resident weight (default double buffer)
            + 2 * 8 * Np * 4)        # bias tile (sublane-padded)


@functools.partial(jax.jit, static_argnames=("out_features", "tm"))
def _linear_forward(x, w_t, b_pad, *, out_features, tm=512):
    """y = x @ W^T + b. w_t is (K, Np) (pre-transposed, N zero-padded to 128)."""
    *lead, in_features = x.shape
    x2d = x.reshape(-1, in_features).astype(jnp.float32)
    M, K = x2d.shape
    Np = w_t.shape[1]

    # Tiny inputs: launch + padding overhead dominates -> plain fused XLA GEMM.
    if M <= 8:
        y2d = (jnp.dot(x2d, w_t[:, :out_features].astype(jnp.float32))
               + b_pad[0, :out_features])
        return y2d.reshape(*lead, out_features)

    # Pad rows only to a sublane multiple (8); never materialize a K-padded copy.
    Mp = _round_up(M, 8)
    if Mp != M:
        x2d = jnp.pad(x2d, ((0, Mp - M), (0, 0)))

    # Row tile: guarantee >= 2 tiles (v7x has 2 TensorCores; neutral on
    # v5e/v6e), then shrink until the tile set fits the VMEM budget.
    tm_eff = min(tm, _round_up(-(-Mp // 2), 8))
    w_bytes = jnp.dtype(w_t.dtype).itemsize
    while _tile_vmem_bytes(tm_eff, K, Np, w_bytes) > _VMEM_BUDGET and tm_eff > 8:
        tm_eff = max(8, _round_up(tm_eff // 2, 8))
    grid = ((Mp + tm_eff - 1) // tm_eff,)   # last block may be partial (masked)

    vmem_limit = int(min(48 << 20,
                         max(32 << 20,
                             _tile_vmem_bytes(tm_eff, K, Np, w_bytes) + (8 << 20))))

    cost = pl.CostEstimate(
        flops=2 * Mp * K * Np,
        transcendentals=0,
        bytes_accessed=Mp * K * 4 + K * Np * w_bytes + Np * 4 + Mp * Np * 4)

    out = pl.pallas_call(
        _linear_kernel,
        out_shape=jax.ShapeDtypeStruct((Mp, Np), jnp.float32),
        grid_spec=pltpu.PrefetchScalarGridSpec(
            num_scalar_prefetch=0,
            grid=grid,
            in_specs=[
                pl.BlockSpec((tm_eff, K), lambda i: (i, 0)),   # activations: row tiles
                pl.BlockSpec((K, Np), lambda i: (0, 0)),       # weight: resident
                pl.BlockSpec((1, Np), lambda i: (0, 0)),       # bias: resident
            ],
            out_specs=pl.BlockSpec((tm_eff, Np), lambda i: (i, 0)),
        ),
        compiler_params=pltpu.CompilerParams(
            dimension_semantics=("parallel",),
            vmem_limit_bytes=vmem_limit),
        cost_estimate=cost,
    )(x2d, w_t, b_pad)

    y2d = out[:M, :out_features]
    return y2d.reshape(*lead, out_features)


# ----------------------------- Module wrapper -------------------------------
class LinearConnection:
    """JAX/Pallas port of the PyTorch `Linear` connection module."""

    def __init__(self, bidirectional, hidden_size_encoder, hidden_size_decoder,
                 key=None, weight_dtype=jnp.float32, tm=512):
        if key is None:
            key = jax.random.PRNGKey(0)
        self.bidirectional = bool(bidirectional)
        num_directions = int(bidirectional) + 1
        in_features = num_directions * hidden_size_encoder
        out_features = hidden_size_decoder
        self.in_features = in_features
        self.out_features = out_features
        self.tm = int(tm)
        self.connection_possibility_status = (in_features == out_features)

        # nn.Linear default init: U(-k, k), k = 1/sqrt(in_features)
        k = 1.0 / np.sqrt(in_features)
        kw, kb = jax.random.split(key)
        self.weight = jax.random.uniform(kw, (out_features, in_features),
                                         jnp.float32, -k, k)   # PyTorch (out, in)
        self.bias = jax.random.uniform(kb, (out_features,), jnp.float32, -k, k)

        # One-time layout: transpose to (in, out); pad only N to a lane
        # multiple (128) so kernel output stores are lane-dense. K stays
        # unpadded (full-extent block), avoiding any activation re-padding.
        Np = _round_up(out_features, 128)
        self.w_t = (jnp.zeros((in_features, Np), weight_dtype)
                    .at[:, :out_features]
                    .set(jnp.transpose(self.weight).astype(weight_dtype)))
        self.b_pad = (jnp.zeros((1, Np), jnp.float32)
                      .at[0, :out_features].set(self.bias))

    def forward(self, x):
        if self.connection_possibility_status:
            # Static identity branch, exactly as in the PyTorch module.
            return x
        return _linear_forward(x, self.w_t, self.b_pad,
                               out_features=self.out_features, tm=self.tm)

    # pure-JAX reference for correctness checking
    def reference_forward(self, x):
        if self.connection_possibility_status:
            return x
        return x @ jnp.transpose(self.weight) + self.bias


# ----------------------------------- main -----------------------------------
if __name__ == "__main__":
    key = jax.random.PRNGKey(0)
    k_params, k_x1, k_x2, k_x3, k_x4 = jax.random.split(key, 5)

    # Case 1: shape mismatch (bidirectional encoder, 64 -> 48): Pallas kernel path.
    mod = LinearConnection(True, 32, 48, key=k_params)
    x = jax.random.normal(k_x1, (2, 8, 64), jnp.float32)        # M = 16 rows
    y = jax.block_until_ready(mod.forward(x))
    assert y.shape == (2, 8, 48)
    np.testing.assert_allclose(np.asarray(y), np.asarray(mod.reference_forward(x)),
                               rtol=1e-5, atol=1e-5)

    # Case 2: row count not a tile multiple -> partial last block, still exact.
    x_odd = jax.random.normal(k_x2, (5, 8, 64), jnp.float32)    # M = 40 rows
    y_odd = jax.block_until_ready(mod.forward(x_odd))
    np.testing.assert_allclose(np.asarray(y_odd),
                               np.asarray(mod.reference_forward(x_odd)),
                               rtol=1e-5, atol=1e-5)

    # Case 3: tiny M -> fused jnp fallback (pallas launch overhead would dominate).
    x_tiny = jax.random.normal(k_x3, (2, 64), jnp.float32)
    y_tiny = jax.block_until_ready(mod.forward(x_tiny))
    np.testing.assert_allclose(np.asarray(y_tiny),
                               np.asarray(mod.reference_forward(x_tiny)),
                               rtol=1e-5, atol=1e-5)

    # Case 4: optional bf16 weights (half the weight DMA bytes, ~2x MXU rate).
    mod_bf16 = LinearConnection(True, 32, 48, key=k_params,
                                weight_dtype=jnp.bfloat16)
    y_bf16 = jax.block_until_ready(mod_bf16.forward(x))
    np.testing.assert_allclose(np.asarray(y_bf16),
                               np.asarray(mod.reference_forward(x)),
                               rtol=2e-2, atol=3e-2)

    # Case 5: matched shapes -> static identity pass-through (no kernel launched).
    mod_id = LinearConnection(False, 32, 32, key=k_params)
    x_id = jax.random.normal(k_x4, (2, 32), jnp.float32)
    np.testing.assert_allclose(np.asarray(mod_id.forward(x_id)), np.asarray(x_id))

    print("KERNEL_OK")
</pallas_src>

<mosaic_0001>
module attributes {stable_mosaic.version = 11 : i64} {
  func.func @_linear_kernel(%arg0: i32, %arg1: memref<8x64xf32, #tpu.memory_space<vmem>>, %arg2: memref<64x128xf32, #tpu.memory_space<vmem>>, %arg3: memref<1x128xf32, #tpu.memory_space<vmem>>, %arg4: memref<8x128xf32, #tpu.memory_space<vmem>>) attributes {dimension_semantics = [#tpu.dimension_semantics<parallel>], iteration_bounds = array<i64: 2>, scalar_prefetch = 0 : i64, scratch_operands = 0 : i64, tpu.core_type = #tpu.core_type<tc>, window_params = [{transform_indices = @transform_0, window_bounds = array<i64: 8, 64>}, {pipeline_mode = #tpu.pipeline_mode<synchronous>, transform_indices = @transform_1, window_bounds = array<i64: 64, 128>}, {pipeline_mode = #tpu.pipeline_mode<synchronous>, transform_indices = @transform_2, window_bounds = array<i64: 1, 128>}, {transform_indices = @transform_3, window_bounds = array<i64: 8, 128>}]} {
    %c0 = arith.constant 0 : index
    %c0_0 = arith.constant 0 : index
    %0 = vector.load %arg1[%c0, %c0_0] : memref<8x64xf32, #tpu.memory_space<vmem>>, vector<8x64xf32>
    %c0_1 = arith.constant 0 : index
    %c0_2 = arith.constant 0 : index
    %1 = vector.load %arg2[%c0_1, %c0_2] : memref<64x128xf32, #tpu.memory_space<vmem>>, vector<64x128xf32>
    %cst = arith.constant dense<0.000000e+00> : vector<8x128xf32>
    %2 = tpu.matmul %0, %1, %cst {dimension_numbers = #tpu.dot_dimension_numbers<[1], [0], [0], [1], [0, 0, 1, 1], [], []>} : vector<8x64xf32>, vector<64x128xf32>, vector<8x128xf32> -> vector<8x128xf32>
    %c0_3 = arith.constant 0 : index
    %c0_4 = arith.constant 0 : index
    %3 = vector.load %arg3[%c0_3, %c0_4] : memref<1x128xf32, #tpu.memory_space<vmem>>, vector<1x128xf32>
    %4 = vector.broadcast %3 : vector<1x128xf32> to vector<8x128xf32>
    %5 = arith.addf %2, %4 : vector<8x128xf32>
    %c0_5 = arith.constant 0 : index
    %c0_6 = arith.constant 0 : index
    %6 = vector.load %arg4[%c0_5, %c0_6] : memref<8x128xf32, #tpu.memory_space<vmem>>, vector<8x128xf32>
    tpu.vector_store %arg4[%c0_5, %c0_6], %5 {strides = array<i32>} : memref<8x128xf32, #tpu.memory_space<vmem>>, vector<8x128xf32>,
    return
  }
  func.func @transform_0(%arg0: i32) -> (i32, i32) {
    %c0_i32 = arith.constant 0 : i32
    %c0_i32_0 = arith.constant 0 : i32
    return %arg0, %c0_i32 : i32, i32
  }
  func.func @transform_1(%arg0: i32) -> (i32, i32) {
    %c0_i32 = arith.constant 0 : i32
    %c0_i32_0 = arith.constant 0 : i32
    %c0_i32_1 = arith.constant 0 : i32
    return %c0_i32, %c0_i32_0 : i32, i32
  }
  func.func @transform_2(%arg0: i32) -> (i32, i32) {
    %c0_i32 = arith.constant 0 : i32
    %c0_i32_0 = arith.constant 0 : i32
    %c0_i32_1 = arith.constant 0 : i32
    return %c0_i32, %c0_i32_0 : i32, i32
  }
  func.func @transform_3(%arg0: i32) -> (i32, i32) {
    %c0_i32 = arith.constant 0 : i32
    %c0_i32_0 = arith.constant 0 : i32
    return %arg0, %c0_i32 : i32, i32
  }
}

</mosaic_0001>

<llo_original>
// kernel: _linear_forward.1
$region0: #{_linear_forward.1}
  #allocation0 [shape = 'u32[]', space=smem, size = 0x4, offset = 0x4, fixed_abs, tag = 'smem constant byte address 0x4 - core index']
  #allocation1 [shape = 'u32[72,128]{1,0:T(1,128)}', space=vmem, size = 0x9000, scoped, tag = 'internal scratch']
  %s0 = inlined_call_operand.hbm [shape: f32[16,64], index: 0, kind: input, shape index: {}]
  %s1 = inlined_call_operand.hbm [shape: f32[64,128], index: 1, kind: input, shape index: {}]
  %s2 = inlined_call_operand.vmem [shape: f32[1,128], index: 2, kind: input, shape index: {}]
  %s3 = inlined_call_operand.vmem [shape: f32[16,128], index: 3, kind: output, shape index: {}]
  %s4 = sld [smem:[#allocation0]]
  $region53: #{_linear_forward.1} parent=0
    _
  %s6 = ssub.s32 1, %s4
  %s7 = scalar_select 0, %s6, %s4
  $region1: #{_linear_forward.1} parent=0
    #allocation2 [shape = 'u8[8192]{0}', space=vmem, size = 0x2000, scoped, tag = 'input window, operand 0']
    #allocation3 [shape = 's32[2]{0}', space=sflag, size = 0x8, scoped, tag = 'scoped memory for _linear_forward.1']
    #allocation4 [shape = 'u8[32768]{0}', space=vmem, size = 0x8000, scoped, tag = 'input window, operand 1, single buffered']
    #allocation5 [shape = 's32[1]{0}', space=sflag, size = 0x4, scoped, tag = 'scoped memory for _linear_forward.1']
    %8 = vsyncpa [#allocation3], 0
    %s9 = scalar_lea.sflag [#allocation3], 1
    %10 = vsyncpa %s9, 0
    %11 = vsyncpa [#allocation5], 0
    loop: start=0, step=1, limit=4
    $region2: #{_linear_forward.1} parent=1 // loop_pre_header
      _
    $region3: #{_linear_forward.1} parent=1 // loop_header
      %s13 = sphi 0, %s17
      %p14 = scmp.ge.s32.totalorder %s13, 4
      %s23 = sphi 0, %s25
      %s26 = sphi 0, %s23
      %s27 = sphi 0, %s26
      %s43 = sphi 0, %s27
      %s47 = sphi 0, %s47
      %s49 = sphi 0, %s47
      %s50 = sphi 0, %s49
      %s64 = sphi 0, %s50
      %s68 = sphi 0, %s68
      %s70 = sphi 0, %s68
      %s71 = sphi 0, %s70
      %s85 = sphi 0, %s71
      %s91 = sphi 0, %s93
      %s94 = sphi 0, %s91
      %s95 = sphi 0, %s94
      %s111 = sphi 0, %s95
    $region4: #{_linear_forward.1} parent=1 // loop_header_branch
      %16 = sbr.rel (%p14) target = $region8
    $region5: #{_linear_forward.1} parent=1 // loop_body
      %s18 = ssub.s32 %s13, 1
      %s19 = ssub.s32 %s13, 2
      %s20 = sadd.s32 %s13, 1
      %s21 = ssub.s32 %s13, %s20
      %p22 = scmp.eq.s32.totalorder %s21, 0
      %s24 = sadd.s32 %s23, 1
      %s25 = scalar_select %p22, %s23, %s24
      %p28 = pneg %p22
      %p29 = scmp.eq.s32.totalorder %s13, 1
      %p30 = por %p28, %p29
      %p31 = scmp.ne.s32.totalorder %s23, %s26
      %p32 = scmp.eq.s32.totalorder %s13, 0
      %p33 = por %p31, %p32
      %p34 = scmp.ne.s32.totalorder %s23, %s26
      %p35 = scmp.eq.s32.totalorder %s18, 1
      %p36 = por %p34, %p35
      %p37 = scmp.ne.s32.totalorder %s26, %s27
      %p38 = scmp.eq.s32.totalorder %s18, 0
      %p39 = por %p37, %p38
      %p40 = scmp.ne.s32.totalorder %s26, %s27
      %p41 = scmp.eq.s32.totalorder %s19, 1
      %p42 = por %p40, %p41
      %p44 = scmp.ne.s32.totalorder %s27, %s43
      %p45 = scmp.eq.s32.totalorder %s19, 0
      %p46 = por %p44, %p45
      %s48 = sadd.s32 %s47, 1
      %p51 = scmp.eq.s32.totalorder %s13, 1
      %p52 = scmp.ne.s32.totalorder %s47, %s49
      %p53 = scmp.eq.s32.totalorder %s13, 0
      %p54 = por %p52, %p53
      %p55 = scmp.ne.s32.totalorder %s47, %s49
      %p56 = scmp.eq.s32.totalorder %s18, 1
      %p57 = por %p55, %p56
      %p58 = scmp.ne.s32.totalorder %s49, %s50
      %p59 = scmp.eq.s32.totalorder %s18, 0
      %p60 = por %p58, %p59
      %p61 = scmp.ne.s32.totalorder %s49, %s50
      %p62 = scmp.eq.s32.totalorder %s19, 1
      %p63 = por %p61, %p62
      %p65 = scmp.ne.s32.totalorder %s50, %s64
      %p66 = scmp.eq.s32.totalorder %s19, 0
      %p67 = por %p65, %p66
      %s69 = sadd.s32 %s68, 1
      %p72 = scmp.eq.s32.totalorder %s13, 1
      %p73 = scmp.ne.s32.totalorder %s68, %s70
      %p74 = scmp.eq.s32.totalorder %s13, 0
      %p75 = por %p73, %p74
      %p76 = scmp.ne.s32.totalorder %s68, %s70
      %p77 = scmp.eq.s32.totalorder %s18, 1
      %p78 = por %p76, %p77
      %p79 = scmp.ne.s32.totalorder %s70, %s71
      %p80 = scmp.eq.s32.totalorder %s18, 0
      %p81 = por %p79, %p80
      %p82 = scmp.ne.s32.totalorder %s70, %s71
      %p83 = scmp.eq.s32.totalorder %s19, 1
      %p84 = por %p82, %p83
      %p86 = scmp.ne.s32.totalorder %s71, %s85
      %p87 = scmp.eq.s32.totalorder %s19, 0
      %p88 = por %p86, %p87
      %s89 = ssub.s32 %s13, %s20
      %p90 = scmp.eq.s32.totalorder %s89, 0
      %s92 = sadd.s32 %s91, 1
      %s93 = scalar_select %p90, %s91, %s92
      %p96 = pneg %p90
      %p97 = scmp.eq.s32.totalorder %s13, 1
      %p98 = por %p96, %p97
      %p99 = scmp.ne.s32.totalorder %s91, %s94
      %p100 = scmp.eq.s32.totalorder %s13, 0
      %p101 = por %p99, %p100
      %p102 = scmp.ne.s32.totalorder %s91, %s94
      %p103 = scmp.eq.s32.totalorder %s18, 1
      %p104 = por %p102, %p103
      %p105 = scmp.ne.s32.totalorder %s94, %s95
      %p106 = scmp.eq.s32.totalorder %s18, 0
      %p107 = por %p105, %p106
      %p108 = scmp.ne.s32.totalorder %s94, %s95
      %p109 = scmp.eq.s32.totalorder %s19, 1
      %p110 = por %p108, %p109
      %p112 = scmp.ne.s32.totalorder %s95, %s111
      %p113 = scmp.eq.s32.totalorder %s19, 0
      %p114 = por %p112, %p113
      %p115 = scmp.le.s32.totalorder 1, %s13
      %p116 = scmp.lt.s32.totalorder %s13, 3
      %p117 = pnand %p115, %p116
      %p118 = pneg %p117
      // Predicated region
      $region9: #{_linear_forward.1} parent=5 // pred_check
        _
      $region10: #{_linear_forward.1} parent=5 // pred_check_branch
        %120 = sbr.rel (%p117) target = $region12
      $region11: #{_linear_forward.1} parent=5 // pred_region
        %s121 = ssub.s32 %s13, 1
        // Predicated region
        $region13: #{_linear_forward.1} parent=11 // pred_check
          %p122 = pneg %p60
        $region14: #{_linear_forward.1} parent=11 // pred_check_branch
          %124 = sbr.rel (%p122) target = $region16
        $region15: #{_linear_forward.1} parent=11 // pred_region
          %126 = vsyncadd [#allocation5], 0
          %s127 = sshll.u32 %s1, 4
          %s128 = int_to_ptr.hbm [resolvable:$true] %s127
          %s129 = sshll.u32 [#allocation4], 4
          %s130 = int_to_ptr.vmem [resolvable:$true] %s129
          %135 = dma.hbm_to_vmem [thread:$0]  %s128, 1024, %s130, [#allocation5], 128, 128, 8
        $region16: #{_linear_forward.1} parent=11 // pred_fallthru
          _
        // Predicated region
        $region17: #{_linear_forward.1} parent=11 // pred_check
          %p136 = pneg %p81
        $region18: #{_linear_forward.1} parent=11 // pred_check_branch
          %138 = sbr.rel (%p136) target = $region20
        $region19: #{_linear_forward.1} parent=11 // pred_region
          _
        $region20: #{_linear_forward.1} parent=11 // pred_fallthru
          _
      $region12: #{_linear_forward.1} parent=5 // pred_fallthru
        _
      %p139 = scmp.lt.s32.totalorder %s13, 2
      // Predicated region
      $region21: #{_linear_forward.1} parent=5 // pred_check
        %p140 = pneg %p139
      $region22: #{_linear_forward.1} parent=5 // pred_check_branch
        %142 = sbr.rel (%p140) target = $region24
      $region23: #{_linear_forward.1} parent=5 // pred_region
        // Predicated region
        $region25: #{_linear_forward.1} parent=23 // pred_check
          %p143 = pneg %p33
        $region26: #{_linear_forward.1} parent=23 // pred_check_branch
          %145 = sbr.rel (%p143) target = $region28
        $region27: #{_linear_forward.1} parent=23 // pred_region
          %s146 = sand.u32 %s23, 1
          %s147 = scalar_lea.sflag [#allocation3], %s146
          %s148 = sand.u32 %s23, 1
          %s149 = smul.addr %s148, 8
          %s150 = scalar_lea.vmem [#allocation2], %s149
          %152 = vsyncadd %s147, 0
          %s153 = smul.addr %s13, 8
          %s154 = scalar_lea.hbm %s0, %s153
          %s156 = sshll.u32 %s154, 4
          %s157 = int_to_ptr.hbm [resolvable:$true] %s156
          %s158 = sshll.u32 %s150, 4
          %s159 = int_to_ptr.vmem [resolvable:$true] %s158
          %161 = dma.hbm_to_vmem [thread:$0]  %s157, 128, %s159, %s147
        $region28: #{_linear_forward.1} parent=23 // pred_fallthru
          _
      $region24: #{_linear_forward.1} parent=5 // pred_fallthru
        _
      %p162 = scmp.le.s32.totalorder 1, %s13
      %p163 = scmp.lt.s32.totalorder %s13, 3
      %p164 = pnand %p162, %p163
      %p165 = pneg %p164
      // Predicated region
      $region29: #{_linear_forward.1} parent=5 // pred_check
        _
      $region30: #{_linear_forward.1} parent=5 // pred_check_branch
        %167 = sbr.rel (%p164) target = $region32
      $region31: #{_linear_forward.1} parent=5 // pred_region
        %s168 = ssub.s32 %s13, 1
        %s169 = sand.u32 %s26, 1
        %s170 = scalar_lea.sflag [#allocation3], %s169
        %s171 = sand.u32 %s26, 1
        %s172 = smul.addr %s171, 8
        %s173 = scalar_lea.vmem [#allocation2], %s172
        // Predicated region
        $region33: #{_linear_forward.1} parent=31 // pred_check
          %p174 = pneg %p39
        $region34: #{_linear_forward.1} parent=31 // pred_check_branch
          %176 = sbr.rel (%p174) target = $region36
        $region35: #{_linear_forward.1} parent=31 // pred_region
          %178 = dma.done %s170, 128
        $region36: #{_linear_forward.1} parent=31 // pred_fallthru
          _
        // Predicated region
        $region37: #{_linear_forward.1} parent=31 // pred_check
          %p179 = pneg %p60
        $region38: #{_linear_forward.1} parent=31 // pred_check_branch
          %181 = sbr.rel (%p179) target = $region40
        $region39: #{_linear_forward.1} parent=31 // pred_region
          %183 = dma.done [#allocation5], 1024
        $region40: #{_linear_forward.1} parent=31 // pred_fallthru
          _
        %s184 = sand.u32 %s26, 1
        %s185 = scalar_lea.sflag [#allocation3], %s184
        %s186 = sand.u32 %s26, 1
        %s187 = smul.addr %s186, 8
        %s188 = scalar_lea.vmem [#allocation2], %s187
        %p189 = pneg %p39
        %p190 = pneg %p36
        %p191 = pneg %p60
        %p192 = pneg %p57
        %p193 = pneg %p81
        %p194 = pneg %p78
        %p195 = pneg %p107
        %p196 = pneg %p104
        %p197 = scmp.lt.s32.totalorder %s18, 1
        %s198 = scalar_select %p197, %s18, 1
        %s199 = smul.addr %s198, 8
        %s200 = scalar_lea.vmem %s3, %s199
        %p201 = scmp.lt.s32.totalorder %s18, 1
        %s202 = scalar_select %p201, %s18, 1
        %s203 = smul.addr %s202, 8
        %s204 = scalar_lea.vmem %s3, %s203
        %v205 = vld [vmem:[%s173] sm:$0xff]
        %v206 = vld [vmem:[#allocation4] sm:$0xff]
        %v207 = vld [vmem:[#allocation4 + $0x8] sm:$0xff]
        %v208 = vld [vmem:[#allocation4 + $0x10] sm:$0xff]
        %v209 = vld [vmem:[#allocation4 + $0x18] sm:$0xff]
        %v210 = vld [vmem:[#allocation4 + $0x20] sm:$0xff]
        %v211 = vld [vmem:[#allocation4 + $0x28] sm:$0xff]
        %v212 = vld [vmem:[#allocation4 + $0x30] sm:$0xff]
        %v213 = vld [vmem:[#allocation4 + $0x38] sm:$0xff]
        %v214 = vld [vmem:[%s2] sm:$0x1]
        %v216 = vperm.slane %v214, 0
        %vm218 = vcmask 523264
        %v220 = vsel %vm218, %v205, 0
        %222 = vmatpush.msra.mxu0 0.0
        %223 = vmatpush.msra.mxu0 0.0
        %224 = vmatpush.msra.mxu0 0.0
        %225 = vmatpush.msra.mxu0 0.0
        %226 = vmatpush.msra.mxu0 0.0
        %227 = vmatpush.msra.mxu0 0.0
        %228 = vmatpush.msra.mxu0 0.0
        %229 = vmatpush.msra.mxu0 0.0
        %230 = vmatpush.msra.mxu0 %v213
        %231 = vmatpush.msra.mxu0 %v212
        %232 = vmatpush.msra.mxu0 %v211
        %233 = vmatpush.msra.mxu0 %v210
        %234 = vmatpush.msra.mxu0 %v209
        %235 = vmatpush.msra.mxu0 %v208
        %236 = vmatpush.msra.mxu0 %v207
        %237 = vmatpush.msra.mxu0 %v206
        %238 = vmatmul.f32.gmra.mxu0 %v220
        %v239 = vpop.f32.mrf.mxu0
        %v240 = vadd.f32 %v216, %v239
        %241 = vdwg.mxu0
        %242 = vst [vmem:[%s204] sm:$0xff] %v240
        %p243 = scmp.lt.s32.totalorder %s18, 1
        %s244 = scalar_select %p243, %s18, 1
        %s245 = smul.addr %s244, 8
        %s246 = scalar_lea.vmem %s3, %s245
        // Predicated region
        $region41: #{_linear_forward.1} parent=31 // pred_check
          %p247 = pneg %p104
        $region42: #{_linear_forward.1} parent=31 // pred_check_branch
          %249 = sbr.rel (%p247) target = $region44
        $region43: #{_linear_forward.1} parent=31 // pred_region
          _
        $region44: #{_linear_forward.1} parent=31 // pred_fallthru
          _
      $region32: #{_linear_forward.1} parent=5 // pred_fallthru
        _
      %p250 = scmp.le.s32.totalorder 2, %s13
      // Predicated region
      $region45: #{_linear_forward.1} parent=5 // pred_check
        %p251 = pneg %p250
      $region46: #{_linear_forward.1} parent=5 // pred_check_branch
        %253 = sbr.rel (%p251) target = $region48
      $region47: #{_linear_forward.1} parent=5 // pred_region
        %s254 = ssub.s32 %s13, 2
        // Predicated region
        $region49: #{_linear_forward.1} parent=47 // pred_check
          %p255 = pneg %p110
        $region50: #{_linear_forward.1} parent=47 // pred_check_branch
          %257 = sbr.rel (%p255) target = $region52
        $region51: #{_linear_forward.1} parent=47 // pred_region
          %p258 = scmp.lt.s32.totalorder %s19, 1
          %s259 = scalar_select %p258, %s19, 1
          %s260 = smul.addr %s259, 8
          %s261 = scalar_lea.vmem %s3, %s260
        $region52: #{_linear_forward.1} parent=47 // pred_fallthru
          _
      $region48: #{_linear_forward.1} parent=5 // pred_fallthru
        _
    $region6: #{_linear_forward.1} parent=1 // loop_footer
      %s17 = sadd.s32 1, %s13
    $region7: #{_linear_forward.1} parent=1 // loop_footer_branch
      %12 = sbr.rel target = $region3
    $region8: #{_linear_forward.1} parent=1 // loop_exit
      _
    %262 = vsyncpa [#allocation3], 1
    %s263 = scalar_lea.sflag [#allocation3], 1
    %264 = vsyncpa %s263, 1
    %265 = vsyncpa [#allocation5], 1

</llo_original>
